<compile_context>
chip_gen: v7x
topology: tpu7x:2x2x1
jax: 0.10.0
libtpu: 0.0.40
codegen_flags: <defaults>
</compile_context>

<pallas_src>
import functools
import math

import jax
import jax.numpy as jnp
from jax.experimental import pallas as pl
from jax.experimental.pallas import tpu as pltpu

LANE = 128
SUBLANE = 8
TILE_R = 2048  # rows per grid step: 2048 * 128 * 4 B = 1 MiB per f32 buffer


def _soft_round_quant_kernel(params_ref, x_ref, noise_ref, o_ref):
    """Elementwise soft-round quant.

    params_ref : SMEM float32[2]        - [alpha, inv_z] with inv_z = 1/(2*tanh(alpha/2))
    x_ref      : VMEM [TILE_R, 128]     - input tile (any float dtype)
    noise_ref  : VMEM float32[TILE_R,128] - U[0,1) noise tile
    o_ref      : VMEM [TILE_R, 128]     - output tile (same dtype as x)
    """
    alpha = params_ref[0]
    inv_z = params_ref[1]

    x = x_ref[...].astype(jnp.float32)

    def s_a(v):
        m = jnp.floor(v) + 0.5
        r = v - m
        return m + jnp.tanh(alpha * r) * inv_z

    # First soft round.
    y = s_a(x)
    # add_noise: y + U[0,1) - 0.5
    y = y + noise_ref[...].astype(jnp.float32) - 0.5
    # Second soft round, store in the caller's dtype.
    o_ref[...] = s_a(y).astype(o_ref.dtype)


@jax.jit
def _run_kernel(params, x2d, noise2d):
    rows = x2d.shape[0]
    tile_r = min(TILE_R, rows)          # rows is always a multiple of 8
    grid = (pl.cdiv(rows, tile_r),)
    return pl.pallas_call(
        _soft_round_quant_kernel,
        out_shape=jax.ShapeDtypeStruct((rows, LANE), x2d.dtype),
        grid=grid,
        in_specs=[
            pl.BlockSpec(memory_space=pltpu.MemorySpace.SMEM),       # [alpha, inv_z]
            pl.BlockSpec((tile_r, LANE), lambda i: (i, 0)),          # x tile
            pl.BlockSpec((tile_r, LANE), lambda i: (i, 0)),          # noise tile
        ],
        out_specs=pl.BlockSpec((tile_r, LANE), lambda i: (i, 0)),
        compiler_params=pltpu.CompilerParams(
            dimension_semantics=("parallel",)),
    )(params, x2d, noise2d)


def soft_round_quant(x, alpha, key=None, seed=0):
    """Pallas implementation of soft_round_Quant.forward(x, alpha).

    x     : float array, any shape (NCHW expected)
    alpha : python float (must be >= 0.001, matching the torch module's check)
    key   : optional jax PRNG key for the uniform noise (varies per call in
            training, like torch.rand); falls back to PRNGKey(seed).
    """
    if alpha < 0.001:
        raise ValueError("alpha is too small!")

    orig_shape = x.shape
    n = math.prod(orig_shape)

    flat = jnp.ravel(x)

    # Pad up to a lane-dense (rows, 128) slab with rows a multiple of 8 —
    # only when actually needed (skips an HBM pass for typical NCHW sizes).
    block = SUBLANE * LANE
    padded_n = -(-n // block) * block
    needs_pad = padded_n != n
    if needs_pad:
        flat = jnp.pad(flat, (0, padded_n - n))
    rows = padded_n // LANE
    x2d = flat.reshape(rows, LANE)

    # Uniform noise in [0, 1), one value per (padded) element.
    if key is None:
        key = jax.random.PRNGKey(seed)
    noise2d = jax.random.uniform(key, (rows, LANE), dtype=jnp.float32)

    # Host-side scalar precompute: inv_z = 1 / (2 * tanh(alpha / 2)).
    inv_z = 1.0 / (2.0 * math.tanh(float(alpha) / 2.0))
    params = jnp.array([float(alpha), inv_z], dtype=jnp.float32)

    out2d = _run_kernel(params, x2d, noise2d)

    out = out2d.reshape(-1)
    if needs_pad:
        out = out[:n]
    return out.reshape(orig_shape)


if __name__ == "__main__":
    key = jax.random.PRNGKey(0)
    k_x, k_noise = jax.random.split(key)

    # Small NCHW input consistent with an image coding module.
    x = jax.random.normal(k_x, (2, 4, 16, 16), dtype=jnp.float32) * 3.0
    alpha = 4.0

    y = soft_round_quant(x, alpha, key=k_noise)
    y = jax.block_until_ready(y)

    assert y.shape == x.shape and y.dtype == x.dtype
    assert bool(jnp.all(jnp.isfinite(y)))
    # Sanity: soft round + noise of +-0.5 followed by soft round keeps values
    # near x (within ~1.5).
    assert bool(jnp.max(jnp.abs(y - x)) < 1.5)

    # Reference check against a pure-JAX implementation of the module.
    def s_a_ref(v, a):
        m = jnp.floor(v) + 0.5
        r = v - m
        z = jnp.tanh(a / 2.0) * 2.0
        return m + jnp.tanh(a * r) / z

    noise_ref = jax.random.uniform(k_noise, (2048 // LANE, LANE),
                                   dtype=jnp.float32).reshape(-1).reshape(x.shape)
    y_ref = s_a_ref(s_a_ref(x, alpha) + noise_ref - 0.5, alpha)
    assert bool(jnp.max(jnp.abs(y - y_ref)) < 1e-5)

    print("KERNEL_OK")
</pallas_src>

<mosaic_0001>
module attributes {stable_mosaic.version = 11 : i64} {
  func.func @_soft_round_quant_kernel(%arg0: i32, %arg1: memref<2xf32, #tpu.memory_space<smem>>, %arg2: memref<16x128xf32, #tpu.memory_space<vmem>>, %arg3: memref<16x128xf32, #tpu.memory_space<vmem>>, %arg4: memref<16x128xf32, #tpu.memory_space<vmem>>) attributes {dimension_semantics = [#tpu.dimension_semantics<parallel>], iteration_bounds = array<i64: 1>, scalar_prefetch = 0 : i64, scratch_operands = 0 : i64, tpu.core_type = #tpu.core_type<tc>, window_params = [{transform_indices = @transform_0, window_bounds = array<i64: 2>}, {transform_indices = @transform_1, window_bounds = array<i64: 16, 128>}, {transform_indices = @transform_2, window_bounds = array<i64: 16, 128>}, {transform_indices = @transform_3, window_bounds = array<i64: 16, 128>}]} {
    %c0 = arith.constant 0 : index
    %0 = memref.load %arg1[%c0] : memref<2xf32, #tpu.memory_space<smem>>
    %c1 = arith.constant 1 : index
    %1 = memref.load %arg1[%c1] : memref<2xf32, #tpu.memory_space<smem>>
    %c0_0 = arith.constant 0 : index
    %c0_1 = arith.constant 0 : index
    %2 = vector.load %arg2[%c0_0, %c0_1] : memref<16x128xf32, #tpu.memory_space<vmem>>, vector<16x128xf32>
    %3 = math.floor %2 : vector<16x128xf32>
    %cst = arith.constant 5.000000e-01 : f32
    %4 = vector.broadcast %cst : f32 to vector<16x128xf32>
    %5 = arith.addf %3, %4 : vector<16x128xf32>
    %6 = arith.subf %2, %5 : vector<16x128xf32>
    %7 = vector.broadcast %0 : f32 to vector<16x128xf32>
    %8 = arith.mulf %7, %6 : vector<16x128xf32>
    %9 = math.tanh %8 : vector<16x128xf32>
    %10 = vector.broadcast %1 : f32 to vector<16x128xf32>
    %11 = arith.mulf %9, %10 : vector<16x128xf32>
    %12 = arith.addf %5, %11 : vector<16x128xf32>
    %c0_2 = arith.constant 0 : index
    %c0_3 = arith.constant 0 : index
    %13 = vector.load %arg3[%c0_2, %c0_3] : memref<16x128xf32, #tpu.memory_space<vmem>>, vector<16x128xf32>
    %14 = arith.addf %12, %13 : vector<16x128xf32>
    %cst_4 = arith.constant 5.000000e-01 : f32
    %15 = vector.broadcast %cst_4 : f32 to vector<16x128xf32>
    %16 = arith.subf %14, %15 : vector<16x128xf32>
    %17 = math.floor %16 : vector<16x128xf32>
    %cst_5 = arith.constant 5.000000e-01 : f32
    %18 = vector.broadcast %cst_5 : f32 to vector<16x128xf32>
    %19 = arith.addf %17, %18 : vector<16x128xf32>
    %20 = arith.subf %16, %19 : vector<16x128xf32>
    %21 = vector.broadcast %0 : f32 to vector<16x128xf32>
    %22 = arith.mulf %21, %20 : vector<16x128xf32>
    %23 = math.tanh %22 : vector<16x128xf32>
    %24 = vector.broadcast %1 : f32 to vector<16x128xf32>
    %25 = arith.mulf %23, %24 : vector<16x128xf32>
    %26 = arith.addf %19, %25 : vector<16x128xf32>
    %c0_6 = arith.constant 0 : index
    %c0_7 = arith.constant 0 : index
    %27 = vector.load %arg4[%c0_6, %c0_7] : memref<16x128xf32, #tpu.memory_space<vmem>>, vector<16x128xf32>
    tpu.vector_store %arg4[%c0_6, %c0_7], %26 {strides = array<i32>} : memref<16x128xf32, #tpu.memory_space<vmem>>, vector<16x128xf32>,
    return
  }
  func.func @transform_0(%arg0: i32) -> i32 {
    %c0_i32 = arith.constant 0 : i32
    %c0_i32_0 = arith.constant 0 : i32
    return %c0_i32 : i32
  }
  func.func @transform_1(%arg0: i32) -> (i32, i32) {
    %c0_i32 = arith.constant 0 : i32
    %c0_i32_0 = arith.constant 0 : i32
    return %arg0, %c0_i32 : i32, i32
  }
  func.func @transform_2(%arg0: i32) -> (i32, i32) {
    %c0_i32 = arith.constant 0 : i32
    %c0_i32_0 = arith.constant 0 : i32
    return %arg0, %c0_i32 : i32, i32
  }
  func.func @transform_3(%arg0: i32) -> (i32, i32) {
    %c0_i32 = arith.constant 0 : i32
    %c0_i32_0 = arith.constant 0 : i32
    return %arg0, %c0_i32 : i32, i32
  }
}

</mosaic_0001>

<llo_original>
// kernel: _run_kernel.1
$region0: #{_run_kernel.1}
  #allocation0 [shape = 'u32[]', space=smem, size = 0x4, offset = 0x4, fixed_abs, tag = 'smem constant byte address 0x4 - core index']
  #allocation1 [shape = 'u32[144,128]{1,0:T(1,128)}', space=vmem, size = 0x12000, scoped, tag = 'internal scratch']
  %s0 = inlined_call_operand.hbm [shape: f32[2], index: 0, kind: input, shape index: {}]
  %s1 = inlined_call_operand.hbm [shape: f32[16,128], index: 1, kind: input, shape index: {}]
  %s2 = inlined_call_operand.hbm [shape: f32[16,128], index: 2, kind: input, shape index: {}]
  %s3 = inlined_call_operand.hbm [shape: f32[16,128], index: 3, kind: output, shape index: {}]
  %s4 = sld [smem:[#allocation0]]
  $region34: #{_run_kernel.1} parent=0
    _
  %s6 = ssub.s32 1, %s4
  %s7 = scalar_select 0, %s6, %s4
  $region1: #{_run_kernel.1} parent=0
    #allocation2 [shape = 'u8[512]{0}', space=smem, size = 0x200, scoped, tag = 'input window, operand 0, single buffered']
    #allocation3 [shape = 's32[1]{0}', space=sflag, size = 0x4, scoped, tag = 'scoped memory for _run_kernel.1']
    #allocation4 [shape = 's32[1]{0}', space=sflag, size = 0x4, scoped, tag = 'scoped memory for _run_kernel.1']
    #allocation5 [shape = 's32[1]{0}', space=sflag, size = 0x4, scoped, tag = 'scoped memory for _run_kernel.1']
    #allocation6 [shape = 'u8[8192]{0}', space=vmem, size = 0x2000, scoped, tag = 'input window, operand 1, single buffered']
    #allocation7 [shape = 'u8[8192]{0}', space=vmem, size = 0x2000, scoped, tag = 'input window, operand 2, single buffered']
    #allocation8 [shape = 's32[1]{0}', space=sflag, size = 0x4, scoped, tag = 'scoped memory for _run_kernel.1']
    #allocation9 [shape = 'u8[8192]{0}', space=vmem, size = 0x2000, scoped, tag = 'output window, operand 0, single buffered']
    %8 = vsyncpa [#allocation5], 0
    %9 = vsyncpa [#allocation3], 0
    %10 = vsyncpa [#allocation8], 0
    %11 = vsyncpa [#allocation4], 0
    // Predicated region
    $region2: #{_run_kernel.1} parent=1 // pred_check
      _
    $region3: #{_run_kernel.1} parent=1 // pred_check_branch
      %13 = sbr.rel (0) target = $region5
    $region4: #{_run_kernel.1} parent=1 // pred_region
      %s15 = ssub.s32 16, 16
      %16 = vsyncadd [#allocation5], %s15
      %19 = dma.hbm_to_smem %s0, 16, [#allocation2], [#allocation5]
    $region5: #{_run_kernel.1} parent=1 // pred_fallthru
      _
    // Predicated region
    $region6: #{_run_kernel.1} parent=1 // pred_check
      _
    $region7: #{_run_kernel.1} parent=1 // pred_check_branch
      %21 = sbr.rel (0) target = $region9
    $region8: #{_run_kernel.1} parent=1 // pred_region
      %s23 = ssub.s32 256, 256
      %24 = vsyncadd [#allocation3], %s23
      %s25 = sshll.u32 [#allocation6], 4
      %s26 = int_to_ptr.vmem [resolvable:$true] %s25
      %31 = dma.hbm_to_vmem [thread:$0]  %s1, 256, %s26, [#allocation3], 128, 128, 8
    $region9: #{_run_kernel.1} parent=1 // pred_fallthru
      _
    // Predicated region
    $region10: #{_run_kernel.1} parent=1 // pred_check
      _
    $region11: #{_run_kernel.1} parent=1 // pred_check_branch
      %33 = sbr.rel (0) target = $region13
    $region12: #{_run_kernel.1} parent=1 // pred_region
      %s35 = ssub.s32 256, 256
      %36 = vsyncadd [#allocation8], %s35
      %s37 = sshll.u32 [#allocation7], 4
      %s38 = int_to_ptr.vmem [resolvable:$true] %s37
      %43 = dma.hbm_to_vmem [thread:$0]  %s2, 256, %s38, [#allocation8], 128, 128, 8
    $region13: #{_run_kernel.1} parent=1 // pred_fallthru
      _
    // Predicated region
    $region14: #{_run_kernel.1} parent=1 // pred_check
      _
    $region15: #{_run_kernel.1} parent=1 // pred_check_branch
      %45 = sbr.rel (0) target = $region17
    $region16: #{_run_kernel.1} parent=1 // pred_region
      %46 = dma.done [#allocation5], 16
    $region17: #{_run_kernel.1} parent=1 // pred_fallthru
      _
    // Predicated region
    $region18: #{_run_kernel.1} parent=1 // pred_check
      _
    $region19: #{_run_kernel.1} parent=1 // pred_check_branch
      %48 = sbr.rel (0) target = $region21
    $region20: #{_run_kernel.1} parent=1 // pred_region
      %49 = dma.done [#allocation3], 256
    $region21: #{_run_kernel.1} parent=1 // pred_fallthru
      _
    // Predicated region
    $region22: #{_run_kernel.1} parent=1 // pred_check
      _
    $region23: #{_run_kernel.1} parent=1 // pred_check_branch
      %51 = sbr.rel (0) target = $region25
    $region24: #{_run_kernel.1} parent=1 // pred_region
      %52 = dma.done [#allocation8], 256
    $region25: #{_run_kernel.1} parent=1 // pred_fallthru
      _
    %53 = sfence
    %s54 = sld [smem:[#allocation2]]
    %s55 = sld [smem:[#allocation2 + $0x1]]
    %v56 = vld [vmem:[#allocation6] sm:$0xff]
    %v57 = vld [vmem:[#allocation6 + $0x8] sm:$0xff]
    %v58 = vfloor.f32 %v56
    %v59 = vfloor.f32 %v57
    %v60 = vadd.f32 %v58, 0.5
    %v61 = vadd.f32 %v59, 0.5
    %v62 = vsub.f32 %v56, %v60
    %v63 = vsub.f32 %v57, %v61
    %v64 = vstv %s54
    %v65 = vmul.f32 %v64, %v62
    %v66 = vmul.f32 %v64, %v63
    %v67 = vtanh.pop %v65
    %v68 = vtanh.pop %v66
    %v69 = vstv %s55
    %v70 = vmul.f32 %v67, %v69
    %v71 = vmul.f32 %v68, %v69
    %v72 = vadd.f32 %v60, %v70
    %v73 = vadd.f32 %v61, %v71
    %v74 = vld [vmem:[#allocation7] sm:$0xff]
    %v75 = vld [vmem:[#allocation7 + $0x8] sm:$0xff]
    %v76 = vadd.f32 %v72, %v74
    %v77 = vadd.f32 %v73, %v75
    %v78 = vsub.f32 %v76, 0.5
    %v79 = vsub.f32 %v77, 0.5
    %v80 = vfloor.f32 %v78
    %v81 = vfloor.f32 %v79
    %v82 = vadd.f32 %v80, 0.5
    %v83 = vadd.f32 %v81, 0.5
    %v84 = vsub.f32 %v78, %v82
    %v85 = vsub.f32 %v79, %v83
    %v86 = vmul.f32 %v64, %v84
    %v87 = vmul.f32 %v64, %v85
    %v88 = vtanh.pop %v86
    %v89 = vtanh.pop %v87
    %v90 = vmul.f32 %v88, %v69
    %v91 = vmul.f32 %v89, %v69
    %v92 = vadd.f32 %v82, %v90
    %v93 = vadd.f32 %v83, %v91
    %94 = vst [vmem:[#allocation9] sm:$0xff] %v92
    %95 = vst [vmem:[#allocation9 + $0x8] sm:$0xff] %v93
    // Predicated region
    $region26: #{_run_kernel.1} parent=1 // pred_check
      _
    $region27: #{_run_kernel.1} parent=1 // pred_check_branch
      %97 = sbr.rel (0) target = $region29
    $region28: #{_run_kernel.1} parent=1 // pred_region
      %s99 = ssub.s32 256, 256
      %100 = vsyncadd [#allocation4], %s99
      %s101 = sshll.u32 [#allocation9], 4
      %s102 = int_to_ptr.vmem [resolvable:$true] %s101
      %107 = dma.vmem_to_hbm [thread:$0]  %s102, 256, %s3, [#allocation4], 128, 128, 8
    $region29: #{_run_kernel.1} parent=1 // pred_fallthru
      _
    // Predicated region
    $region30: #{_run_kernel.1} parent=1 // pred_check
      _
    $region31: #{_run_kernel.1} parent=1 // pred_check_branch
      %109 = sbr.rel (0) target = $region33
    $region32: #{_run_kernel.1} parent=1 // pred_region
      %110 = dma.done [#allocation4], 256
    $region33: #{_run_kernel.1} parent=1 // pred_fallthru
      _
    %111 = vsyncpa [#allocation3], 1
    %112 = vsyncpa [#allocation8], 1
    %113 = vsyncpa [#allocation4], 1
    %114 = vsyncpa [#allocation5], 1

</llo_original>
